<compile_context>
chip_gen: v7x
topology: tpu7x:2x2x1
jax: 0.10.0
libtpu: 0.0.40
codegen_flags: <defaults>
</compile_context>

<pallas_src>
import jax
import jax.numpy as jnp
from jax import lax
from jax.experimental import pallas as pl
from jax.experimental.pallas import tpu as pltpu


def _conv3x3_kernel(x_main_ref, x_top_ref, x_bot_ref, w_ref, b_ref, o_ref, s_ref):
    # x_main_ref: (1, tile_h, Wp, Cin)  bf16  rows [i*tile_h, (i+1)*tile_h)
    # x_top_ref : (1, 1, Wp, Cin)       bf16  row i*tile_h - 1  (ignored when i == 0)
    # x_bot_ref : (1, 1, Wp, Cin)       bf16  row (i+1)*tile_h  (ignored when i == last)
    # w_ref     : (3, Cin, 3*Cpad)      bf16  w_ref[ky, ci, kx*Cpad + co] = W[co, ci, ky, kx]
    # b_ref     : (1, Cpad)             f32
    # o_ref     : (1, tile_h, Wp, Cpad) output tile
    # s_ref     : (tile_h+2, Wp, Cin)   bf16 staging: rows [i*tile_h - 1, (i+1)*tile_h]
    tile_h = x_main_ref.shape[1]
    wdim = x_main_ref.shape[2]
    cin = x_main_ref.shape[3]
    cpad = o_ref.shape[3]

    i = pl.program_id(1)
    last = pl.num_programs(1) - 1

    top = jnp.where(i == 0, jnp.zeros_like(x_top_ref[0]), x_top_ref[0])     # zero pad at top
    bot = jnp.where(i == last, jnp.zeros_like(x_bot_ref[0]), x_bot_ref[0])  # zero pad at bottom

    # Stage the tile and its halos once (single copy of the Cin-wide input).
    s_ref[0:1] = top
    s_ref[1:tile_h + 1] = x_main_ref[0]
    s_ref[tile_h + 1:tile_h + 2] = bot

    # Three ky-matmuls, each K=Cin, N=3*Cpad (all kx taps at once), f32 accumulation.
    def lhs(ky):
        return s_ref[ky:ky + tile_h].reshape(tile_h * wdim, cin)

    acc = jnp.dot(lhs(0), w_ref[0], preferred_element_type=jnp.float32)
    acc = acc + jnp.dot(lhs(1), w_ref[1], preferred_element_type=jnp.float32)
    acc = acc + jnp.dot(lhs(2), w_ref[2], preferred_element_type=jnp.float32)
    acc = acc.reshape(tile_h, wdim, 3 * cpad)

    tap_l = acc[:, :, 0:cpad]               # kx = 0: out[:, w] += tap_l[:, w-1]
    tap_c = acc[:, :, cpad:2 * cpad]        # kx = 1: center
    tap_r = acc[:, :, 2 * cpad:3 * cpad]    # kx = 2: out[:, w] += tap_r[:, w+1]

    # dx = +/-1 shifts on the (Cpad-wide) result via XLU roll + boundary mask
    # (zero conv padding); plain aligned adds, no misaligned partial stores.
    col = lax.broadcasted_iota(jnp.int32, (tile_h, wdim, cpad), 1)
    tap_l = jnp.where(col == 0, 0.0, pltpu.roll(tap_l, shift=1, axis=1))
    tap_r = jnp.where(col == wdim - 1, 0.0, pltpu.roll(tap_r, shift=wdim - 1, axis=1))

    out = tap_c + tap_l + tap_r + b_ref[0, :][None, None, :]
    o_ref[...] = out[None].astype(o_ref.dtype)    # single lane-dense store


def _vmem_limit_bytes():
    """Generation-aware scoped-VMEM limit (~96 MiB on 128 MiB parts, ~48 MiB on v7x)."""
    try:
        info = pltpu.get_tpu_info()
        phys = int(getattr(info, "vmem_capacity_bytes", 0)) or 64 * 1024 * 1024
    except Exception:
        phys = 64 * 1024 * 1024
    return min(96 * 1024 * 1024, (phys * 3) // 4)


def _pick_tile_h(N, H, Wp, cin, cpad, out_bytes, vmem_limit):
    """Pick tile_h from a realistic per-step VMEM budget (~45% of the limit).

    Accounts for: double-buffered main input / output / halo blocks, the
    (double-buffered) weight block, the bf16 staging scratch and ~2 copies of
    the f32 (3*Cpad)-wide matmul intermediates.  Also pushes tile_h*W >= 512
    for MXU M-feeding, and forces >= 2 H-tiles when N == 1 (v7x megacore).
    """
    budget = int(vmem_limit * 0.45)
    bf16 = 2
    fixed = 2 * (3 * cin * 3 * cpad * bf16)       # weight block, double-buffered
    fixed += 2 * 2 * (Wp * cin * bf16)            # two 1-row halo blocks, double-buffered
    fixed += 2 * (Wp * cin * bf16)                # staging halo rows (+2)
    fixed += 2 * cpad * 4                         # bias
    per_row = Wp * (2 * cin * bf16               # main input block (x2 buffers)
                    + cin * bf16                  # staging
                    + 2 * cpad * out_bytes        # output block (x2 buffers)
                    + 2 * 3 * cpad * 4)           # f32 intermediates (~2 copies)
    cap = max(1, (budget - fixed) // max(per_row, 1))

    want = max(1, -(-512 // Wp))                  # ceil(512 / Wp) rows to feed the MXU M dim
    tile_h = min(cap, H)
    tile_h = max(tile_h, min(want, H))
    if N == 1 and H >= 2:
        tile_h = min(tile_h, -(-H // 2))          # >= 2 H-tiles so both v7x cores get work
    return max(1, min(tile_h, H))


def key_projection_pallas(x_nchw, weight, bias, *, tile_h=None):
    """KeyProjection.forward: x_nchw (N, Cin, H, W), weight (Cout, Cin, 3, 3), bias (Cout,)."""
    N, Cin, H, W = x_nchw.shape
    Cout = weight.shape[0]
    Cpad = ((Cout + 127) // 128) * 128            # lane-dense output channels
    Wp = ((W + 7) // 8) * 8                       # sublane-aligned width (layout-free reshape)
    out_dtype = x_nchw.dtype                      # TODO(synk): emit bf16 here if downstream tolerates it
    out_bytes = jnp.dtype(out_dtype).itemsize

    vmem_limit = _vmem_limit_bytes()
    if tile_h is None:
        tile_h = _pick_tile_h(N, H, Wp, Cin, Cpad, out_bytes, vmem_limit)
    tile_h = max(1, min(int(tile_h), H))
    Hp = -(-H // tile_h) * tile_h                 # pad H instead of requiring tile_h | H

    # NCHW -> NHWC, bf16 at the boundary (halves input HBM traffic; MXU operands are bf16).
    # TODO(synk): drop this transpose if the producer can emit channels-last directly.
    x = jnp.transpose(x_nchw.astype(jnp.bfloat16), (0, 2, 3, 1))
    if Hp != H or Wp != W:
        x = jnp.pad(x, ((0, 0), (0, Hp - H), (0, Wp - W), (0, 0)))

    # Weights: (Cout, Cin, ky, kx) -> (ky, Cin, kx*Cpad + co) bf16; bias -> (1, Cpad) f32.
    w_k = jnp.transpose(weight, (2, 1, 3, 0))                     # (ky, Cin, kx, Cout)
    w_k = jnp.pad(w_k, ((0, 0), (0, 0), (0, 0), (0, Cpad - Cout)))
    w_k = w_k.reshape(3, Cin, 3 * Cpad).astype(jnp.bfloat16)
    b2 = jnp.pad(bias, (0, Cpad - Cout)).reshape(1, Cpad).astype(jnp.float32)

    def main_map(n, i):
        return (n, i, 0, 0)

    def top_map(n, i):   # single-row halo above the tile (block size 1 along H)
        return (n, jnp.maximum(i * tile_h - 1, 0), 0, 0)

    def bot_map(n, i):   # single-row halo below the tile
        return (n, jnp.minimum((i + 1) * tile_h, Hp - 1), 0, 0)

    # TODO(synk): pipeline_mode=pl.Buffered(1) on the weight/bias specs would free one
    # buffer of constant-operand VMEM (most useful on v7x's 64 MiB).
    out = pl.pallas_call(
        _conv3x3_kernel,
        out_shape=jax.ShapeDtypeStruct((N, Hp, Wp, Cpad), out_dtype),
        grid_spec=pltpu.PrefetchScalarGridSpec(
            num_scalar_prefetch=0,
            grid=(N, Hp // tile_h),
            in_specs=[
                pl.BlockSpec((1, tile_h, Wp, Cin), main_map),
                pl.BlockSpec((1, 1, Wp, Cin), top_map),
                pl.BlockSpec((1, 1, Wp, Cin), bot_map),
                pl.BlockSpec((3, Cin, 3 * Cpad), lambda n, i: (0, 0, 0)),
                pl.BlockSpec((1, Cpad), lambda n, i: (0, 0)),
            ],
            out_specs=pl.BlockSpec((1, tile_h, Wp, Cpad), main_map),
            scratch_shapes=[pltpu.VMEM((tile_h + 2, Wp, Cin), jnp.bfloat16)],
        ),
        compiler_params=pltpu.CompilerParams(
            dimension_semantics=("parallel", "parallel"),
            vmem_limit_bytes=int(vmem_limit),
        ),
    )(x, x, x, w_k, b2)

    # Drop spatial/channel padding, back to NCHW.
    return jnp.transpose(out[:, :H, :W, :Cout], (0, 3, 1, 2))


def make_key_projection_params(indim, keydim, seed=0):
    """Deterministic params mirroring the module __init__: orthogonal weight
    (keydim, indim, 3, 3) via sign-corrected QR (a la torch.nn.init.orthogonal_),
    zero bias (keydim,)."""
    key = jax.random.PRNGKey(seed)
    rows, cols = keydim, indim * 9
    a = jax.random.normal(key, (max(rows, cols), min(rows, cols)), dtype=jnp.float32)
    q, r = jnp.linalg.qr(a)
    q = q * jnp.sign(jnp.diagonal(r))[None, :]
    w2d = q.T if rows < cols else q
    weight = w2d.reshape(keydim, indim, 3, 3).astype(jnp.float32)
    bias = jnp.zeros((keydim,), dtype=jnp.float32)
    return weight, bias


if __name__ == "__main__":
    N, Cin, H, W = 2, 4, 16, 16
    Cout = 8

    key = jax.random.PRNGKey(0)
    x = jax.random.normal(key, (N, Cin, H, W), dtype=jnp.float32)
    weight, bias = make_key_projection_params(Cin, Cout, seed=0)

    # Explicit spatial tiling (4 H-tiles per image) to exercise the halo paths.
    out = key_projection_pallas(x, weight, bias, tile_h=4)
    out = jax.block_until_ready(out)

    # Reference: same semantics as the PyTorch module (bf16 MXU operands =>
    # loosened tolerance; accumulation stays f32).
    ref = lax.conv_general_dilated(
        x, weight, window_strides=(1, 1), padding=((1, 1), (1, 1)),
        dimension_numbers=("NCHW", "OIHW", "NCHW")) + bias[None, :, None, None]
    assert out.shape == (N, Cout, H, W)
    assert jnp.allclose(out, ref, atol=2e-2, rtol=2e-2), \
        float(jnp.max(jnp.abs(out - ref)))

    # Also exercise the auto-picked tile path (single H tile here).
    out2 = jax.block_until_ready(key_projection_pallas(x, weight, bias))
    assert jnp.allclose(out2, ref, atol=2e-2, rtol=2e-2)

    print("KERNEL_OK")
</pallas_src>

<mosaic_0001>
module attributes {stable_mosaic.version = 11 : i64} {
  func.func @_conv3x3_kernel(%arg0: i32, %arg1: i32, %arg2: memref<1x4x16x4xbf16, #tpu.memory_space<vmem>>, %arg3: memref<1x1x16x4xbf16, #tpu.memory_space<vmem>>, %arg4: memref<1x1x16x4xbf16, #tpu.memory_space<vmem>>, %arg5: memref<3x4x384xbf16, #tpu.memory_space<vmem>>, %arg6: memref<1x128xf32, #tpu.memory_space<vmem>>, %arg7: memref<1x4x16x128xf32, #tpu.memory_space<vmem>>, %arg8: memref<6x16x4xbf16, #tpu.memory_space<vmem>>) attributes {dimension_semantics = [#tpu.dimension_semantics<parallel>, #tpu.dimension_semantics<parallel>], iteration_bounds = array<i64: 2, 4>, scalar_prefetch = 0 : i64, scratch_operands = 1 : i64, tpu.core_type = #tpu.core_type<tc>, window_params = [{transform_indices = @transform_0, window_bounds = array<i64: 1, 4, 16, 4>}, {transform_indices = @transform_1, window_bounds = array<i64: 1, 1, 16, 4>}, {transform_indices = @transform_2, window_bounds = array<i64: 1, 1, 16, 4>}, {pipeline_mode = #tpu.pipeline_mode<synchronous>, transform_indices = @transform_3, window_bounds = array<i64: 3, 4, 384>}, {pipeline_mode = #tpu.pipeline_mode<synchronous>, transform_indices = @transform_4, window_bounds = array<i64: 1, 128>}, {transform_indices = @transform_5, window_bounds = array<i64: 1, 4, 16, 128>}]} {
    %c0_i32 = arith.constant 0 : i32
    %0 = arith.cmpi eq, %arg1, %c0_i32 : i32
    %cst = arith.constant 0.000000e+00 : bf16
    %1 = vector.broadcast %cst : bf16 to vector<1x16x4xbf16>
    %c0 = arith.constant 0 : index
    %c0_0 = arith.constant 0 : index
    %c0_1 = arith.constant 0 : index
    %c0_2 = arith.constant 0 : index
    %2 = vector.load %arg3[%c0, %c0_0, %c0_1, %c0_2] : memref<1x1x16x4xbf16, #tpu.memory_space<vmem>>, vector<1x1x16x4xbf16>
    %3 = vector.shape_cast %2 : vector<1x1x16x4xbf16> to vector<1x16x4xbf16>
    %4 = arith.select %0, %1, %3 : vector<1x16x4xbf16>
    %c3_i32 = arith.constant 3 : i32
    %5 = arith.cmpi eq, %arg1, %c3_i32 : i32
    %cst_3 = arith.constant 0.000000e+00 : bf16
    %6 = vector.broadcast %cst_3 : bf16 to vector<1x16x4xbf16>
    %c0_4 = arith.constant 0 : index
    %c0_5 = arith.constant 0 : index
    %c0_6 = arith.constant 0 : index
    %c0_7 = arith.constant 0 : index
    %7 = vector.load %arg4[%c0_4, %c0_5, %c0_6, %c0_7] : memref<1x1x16x4xbf16, #tpu.memory_space<vmem>>, vector<1x1x16x4xbf16>
    %8 = vector.shape_cast %7 : vector<1x1x16x4xbf16> to vector<1x16x4xbf16>
    %9 = arith.select %5, %6, %8 : vector<1x16x4xbf16>
    %c0_8 = arith.constant 0 : index
    %c0_9 = arith.constant 0 : index
    %c0_10 = arith.constant 0 : index
    %10 = vector.load %arg8[%c0_8, %c0_9, %c0_10] : memref<6x16x4xbf16, #tpu.memory_space<vmem>>, vector<1x16x4xbf16>
    tpu.vector_store %arg8[%c0_8, %c0_9, %c0_10], %4 {strides = array<i32>} : memref<6x16x4xbf16, #tpu.memory_space<vmem>>, vector<1x16x4xbf16>,
    %c0_11 = arith.constant 0 : index
    %c0_12 = arith.constant 0 : index
    %c0_13 = arith.constant 0 : index
    %c0_14 = arith.constant 0 : index
    %11 = vector.load %arg2[%c0_11, %c0_12, %c0_13, %c0_14] : memref<1x4x16x4xbf16, #tpu.memory_space<vmem>>, vector<1x4x16x4xbf16>
    %12 = vector.shape_cast %11 : vector<1x4x16x4xbf16> to vector<4x16x4xbf16>
    %c1 = arith.constant 1 : index
    %c0_15 = arith.constant 0 : index
    %c0_16 = arith.constant 0 : index
    %13 = vector.load %arg8[%c1, %c0_15, %c0_16] : memref<6x16x4xbf16, #tpu.memory_space<vmem>>, vector<4x16x4xbf16>
    tpu.vector_store %arg8[%c1, %c0_15, %c0_16], %12 {strides = array<i32>} : memref<6x16x4xbf16, #tpu.memory_space<vmem>>, vector<4x16x4xbf16>,
    %c5 = arith.constant 5 : index
    %c0_17 = arith.constant 0 : index
    %c0_18 = arith.constant 0 : index
    %14 = vector.load %arg8[%c5, %c0_17, %c0_18] : memref<6x16x4xbf16, #tpu.memory_space<vmem>>, vector<1x16x4xbf16>
    tpu.vector_store %arg8[%c5, %c0_17, %c0_18], %9 {strides = array<i32>} : memref<6x16x4xbf16, #tpu.memory_space<vmem>>, vector<1x16x4xbf16>,
    %c0_19 = arith.constant 0 : index
    %c0_20 = arith.constant 0 : index
    %c0_21 = arith.constant 0 : index
    %15 = vector.load %arg8[%c0_19, %c0_20, %c0_21] : memref<6x16x4xbf16, #tpu.memory_space<vmem>>, vector<4x16x4xbf16>
    %16 = vector.shape_cast %15 : vector<4x16x4xbf16> to vector<64x4xbf16>
    %c0_22 = arith.constant 0 : index
    %c0_23 = arith.constant 0 : index
    %c0_24 = arith.constant 0 : index
    %17 = vector.load %arg5[%c0_22, %c0_23, %c0_24] : memref<3x4x384xbf16, #tpu.memory_space<vmem>>, vector<1x4x384xbf16>
    %18 = vector.shape_cast %17 : vector<1x4x384xbf16> to vector<4x384xbf16>
    %cst_25 = arith.constant dense<0.000000e+00> : vector<64x384xf32>
    %19 = tpu.matmul %16, %18, %cst_25 {dimension_numbers = #tpu.dot_dimension_numbers<[1], [0], [0], [1], [0, 0, 1, 1], [], []>} : vector<64x4xbf16>, vector<4x384xbf16>, vector<64x384xf32> -> vector<64x384xf32>
    %c1_26 = arith.constant 1 : index
    %c0_27 = arith.constant 0 : index
    %c0_28 = arith.constant 0 : index
    %20 = vector.load %arg8[%c1_26, %c0_27, %c0_28] : memref<6x16x4xbf16, #tpu.memory_space<vmem>>, vector<4x16x4xbf16>
    %21 = vector.shape_cast %20 : vector<4x16x4xbf16> to vector<64x4xbf16>
    %c1_29 = arith.constant 1 : index
    %c0_30 = arith.constant 0 : index
    %c0_31 = arith.constant 0 : index
    %22 = vector.load %arg5[%c1_29, %c0_30, %c0_31] : memref<3x4x384xbf16, #tpu.memory_space<vmem>>, vector<1x4x384xbf16>
    %23 = vector.shape_cast %22 : vector<1x4x384xbf16> to vector<4x384xbf16>
    %cst_32 = arith.constant dense<0.000000e+00> : vector<64x384xf32>
    %24 = tpu.matmul %21, %23, %cst_32 {dimension_numbers = #tpu.dot_dimension_numbers<[1], [0], [0], [1], [0, 0, 1, 1], [], []>} : vector<64x4xbf16>, vector<4x384xbf16>, vector<64x384xf32> -> vector<64x384xf32>
    %25 = arith.addf %19, %24 : vector<64x384xf32>
    %c2 = arith.constant 2 : index
    %c0_33 = arith.constant 0 : index
    %c0_34 = arith.constant 0 : index
    %26 = vector.load %arg8[%c2, %c0_33, %c0_34] : memref<6x16x4xbf16, #tpu.memory_space<vmem>>, vector<4x16x4xbf16>
    %27 = vector.shape_cast %26 : vector<4x16x4xbf16> to vector<64x4xbf16>
    %c2_35 = arith.constant 2 : index
    %c0_36 = arith.constant 0 : index
    %c0_37 = arith.constant 0 : index
    %28 = vector.load %arg5[%c2_35, %c0_36, %c0_37] : memref<3x4x384xbf16, #tpu.memory_space<vmem>>, vector<1x4x384xbf16>
    %29 = vector.shape_cast %28 : vector<1x4x384xbf16> to vector<4x384xbf16>
    %cst_38 = arith.constant dense<0.000000e+00> : vector<64x384xf32>
    %30 = tpu.matmul %27, %29, %cst_38 {dimension_numbers = #tpu.dot_dimension_numbers<[1], [0], [0], [1], [0, 0, 1, 1], [], []>} : vector<64x4xbf16>, vector<4x384xbf16>, vector<64x384xf32> -> vector<64x384xf32>
    %31 = arith.addf %25, %30 : vector<64x384xf32>
    %32 = vector.shape_cast %31 : vector<64x384xf32> to vector<4x16x384xf32>
    %33 = vector.extract_strided_slice %32 {offsets = [0, 0, 0], sizes = [4, 16, 128], strides = [1, 1, 1]} : vector<4x16x384xf32> to vector<4x16x128xf32>
    %34 = vector.extract_strided_slice %32 {offsets = [0, 0, 128], sizes = [4, 16, 128], strides = [1, 1, 1]} : vector<4x16x384xf32> to vector<4x16x128xf32>
    %35 = vector.extract_strided_slice %32 {offsets = [0, 0, 256], sizes = [4, 16, 128], strides = [1, 1, 1]} : vector<4x16x384xf32> to vector<4x16x128xf32>
    %36 = tpu.iota {dimensions = array<i32: 1>} : vector<4x16x128xi32>
    %c0_i32_39 = arith.constant 0 : i32
    %37 = vector.broadcast %c0_i32_39 : i32 to vector<4x16x128xi32>
    %38 = arith.cmpi eq, %36, %37 : vector<4x16x128xi32>
    %c1_i32 = arith.constant 1 : i32
    %39 = tpu.dynamic_rotate %33 by %c1_i32 dim 1 : vector<4x16x128xf32>, i32 -> vector<4x16x128xf32>
    %cst_40 = arith.constant 0.000000e+00 : f32
    %40 = vector.broadcast %cst_40 : f32 to vector<4x16x128xf32>
    %41 = arith.select %38, %40, %39 : vector<4x16x128xi1>, vector<4x16x128xf32>
    %c15_i32 = arith.constant 15 : i32
    %42 = vector.broadcast %c15_i32 : i32 to vector<4x16x128xi32>
    %43 = arith.cmpi eq, %36, %42 : vector<4x16x128xi32>
    %c15_i32_41 = arith.constant 15 : i32
    %44 = tpu.dynamic_rotate %35 by %c15_i32_41 dim 1 : vector<4x16x128xf32>, i32 -> vector<4x16x128xf32>
    %cst_42 = arith.constant 0.000000e+00 : f32
    %45 = vector.broadcast %cst_42 : f32 to vector<4x16x128xf32>
    %46 = arith.select %43, %45, %44 : vector<4x16x128xi1>, vector<4x16x128xf32>
    %47 = arith.addf %34, %41 : vector<4x16x128xf32>
    %48 = arith.addf %47, %46 : vector<4x16x128xf32>
    %c0_43 = arith.constant 0 : index
    %c0_44 = arith.constant 0 : index
    %49 = vector.load %arg6[%c0_43, %c0_44] : memref<1x128xf32, #tpu.memory_space<vmem>>, vector<1x128xf32>
    %50 = vector.shape_cast %49 : vector<1x128xf32> to vector<128xf32>
    %51 = vector.shape_cast %50 : vector<128xf32> to vector<1x1x128xf32>
    %52 = vector.broadcast %51 : vector<1x1x128xf32> to vector<4x16x128xf32>
    %53 = arith.addf %48, %52 : vector<4x16x128xf32>
    %54 = vector.shape_cast %53 : vector<4x16x128xf32> to vector<1x4x16x128xf32>
    %c0_45 = arith.constant 0 : index
    %c0_46 = arith.constant 0 : index
    %c0_47 = arith.constant 0 : index
    %c0_48 = arith.constant 0 : index
    %55 = vector.load %arg7[%c0_45, %c0_46, %c0_47, %c0_48] : memref<1x4x16x128xf32, #tpu.memory_space<vmem>>, vector<1x4x16x128xf32>
    tpu.vector_store %arg7[%c0_45, %c0_46, %c0_47, %c0_48], %54 {strides = array<i32>} : memref<1x4x16x128xf32, #tpu.memory_space<vmem>>, vector<1x4x16x128xf32>,
    return
  }
  func.func @transform_0(%arg0: i32, %arg1: i32) -> (i32, i32, i32, i32) {
    %c0_i32 = arith.constant 0 : i32
    %c0_i32_0 = arith.constant 0 : i32
    %c0_i32_1 = arith.constant 0 : i32
    return %arg0, %arg1, %c0_i32, %c0_i32_0 : i32, i32, i32, i32
  }
  func.func @transform_1(%arg0: i32, %arg1: i32) -> (i32, i32, i32, i32) {
    %c4_i32 = arith.constant 4 : i32
    %0 = arith.muli %arg1, %c4_i32 : i32
    %c1_i32 = arith.constant 1 : i32
    %1 = arith.subi %0, %c1_i32 : i32
    %c0_i32 = arith.constant 0 : i32
    %2 = arith.maxsi %1, %c0_i32 : i32
    %c0_i32_0 = arith.constant 0 : i32
    %c0_i32_1 = arith.constant 0 : i32
    %c0_i32_2 = arith.constant 0 : i32
    return %arg0, %2, %c0_i32_0, %c0_i32_1 : i32, i32, i32, i32
  }
  func.func @transform_2(%arg0: i32, %arg1: i32) -> (i32, i32, i32, i32) {
    %c1_i32 = arith.constant 1 : i32
    %0 = arith.addi %arg1, %c1_i32 : i32
    %c4_i32 = arith.constant 4 : i32
    %1 = arith.muli %0, %c4_i32 : i32
    %c15_i32 = arith.constant 15 : i32
    %2 = arith.minsi %1, %c15_i32 : i32
    %c0_i32 = arith.constant 0 : i32
    %c0_i32_0 = arith.constant 0 : i32
    %c0_i32_1 = arith.constant 0 : i32
    return %arg0, %2, %c0_i32, %c0_i32_0 : i32, i32, i32, i32
  }
  func.func @transform_3(%arg0: i32, %arg1: i32) -> (i32, i32, i32) {
    %c0_i32 = arith.constant 0 : i32
    %c0_i32_0 = arith.constant 0 : i32
    %c0_i32_1 = arith.constant 0 : i32
    %c0_i32_2 = arith.constant 0 : i32
    return %c0_i32, %c0_i32_0, %c0_i32_1 : i32, i32, i32
  }
  func.func @transform_4(%arg0: i32, %arg1: i32) -> (i32, i32) {
    %c0_i32 = arith.constant 0 : i32
    %c0_i32_0 = arith.constant 0 : i32
    %c0_i32_1 = arith.constant 0 : i32
    return %c0_i32, %c0_i32_0 : i32, i32
  }
  func.func @transform_5(%arg0: i32, %arg1: i32) -> (i32, i32, i32, i32) {
    %c0_i32 = arith.constant 0 : i32
    %c0_i32_0 = arith.constant 0 : i32
    %c0_i32_1 = arith.constant 0 : i32
    return %arg0, %arg1, %c0_i32, %c0_i32_0 : i32, i32, i32, i32
  }
}

</mosaic_0001>

<llo_original>
// kernel: tpu_custom_call.1
$region0: #{tpu_custom_call.1}
  #allocation0 [shape = 'u32[]', space=smem, size = 0x4, offset = 0x4, fixed_abs, tag = 'smem constant byte address 0x4 - core index']
  #allocation1 [shape = 'u32[144,128]{1,0:T(1,128)}', space=vmem, size = 0x12000, scoped, tag = 'internal scratch']
  #allocation2 [shape = 'bf16[6,16,4]{2,1,0:T(16,128)(2,1)}', space=vmem, size = 0x6000, scoped, tag = 'scratch operand']
  %s0 = inlined_call_operand.vmem [shape: bf16[2,16,16,4], index: 0, kind: input, shape index: {}]
  %s1 = inlined_call_operand.vmem [shape: bf16[2,16,16,4], index: 1, kind: input, shape index: {}]
  %s2 = inlined_call_operand.vmem [shape: bf16[2,16,16,4], index: 2, kind: input, shape index: {}]
  %s3 = inlined_call_operand.vmem [shape: bf16[3,4,384], index: 3, kind: input, shape index: {}]
  %s4 = inlined_call_operand.vmem [shape: f32[1,128], index: 4, kind: input, shape index: {}]
  %s5 = inlined_call_operand.hbm [shape: f32[2,16,16,128], index: 5, kind: output, shape index: {}]
  %s6 = sld [smem:[#allocation0]]
  $region53: #{tpu_custom_call.1} parent=0
    _
  %s8 = ssub.s32 1, %s6
  %s9 = scalar_select 0, %s8, %s6
  $region1: #{tpu_custom_call.1} parent=0
    #allocation3 [shape = 'u8[65536]{0}', space=vmem, size = 0x10000, scoped, tag = 'output window, operand 0']
    #allocation4 [shape = 's32[2]{0}', space=sflag, size = 0x8, scoped, tag = 'scoped memory for tpu_custom_call.1']
    %10 = vsyncpa [#allocation4], 0
    %s11 = scalar_lea.sflag [#allocation4], 1
    %12 = vsyncpa %s11, 0
    loop: start=0, step=1, limit=10
    $region2: #{tpu_custom_call.1} parent=1 // loop_pre_header
      _
    $region3: #{tpu_custom_call.1} parent=1 // loop_header
      %s14 = sphi 0, %s18
      %p15 = scmp.ge.s32.totalorder %s14, 10
      %s21 = sphi 0, %s33
      %s22 = sphi 0, %s29
      %s23 = sphi 0, %s21
      %s24 = sphi 0, %s22
      %s25 = sphi 0, %s23
      %s26 = sphi 0, %s24
      %s38 = sphi 0, %s40
      %s41 = sphi 0, %s38
      %s42 = sphi 0, %s41
      %s58 = sphi 0, %s42
      %s74 = sphi 0, %s76
      %s77 = sphi 0, %s74
      %s78 = sphi 0, %s77
      %s94 = sphi 0, %s78
      %s110 = sphi 0, %s112
      %s113 = sphi 0, %s110
      %s114 = sphi 0, %s113
      %s130 = sphi 0, %s114
      %s134 = sphi 0, %s134
      %s136 = sphi 0, %s134
      %s137 = sphi 0, %s136
      %s151 = sphi 0, %s137
      %s155 = sphi 0, %s155
      %s157 = sphi 0, %s155
      %s158 = sphi 0, %s157
      %s172 = sphi 0, %s158
      %s180 = sphi 0, %s182
      %s183 = sphi 0, %s180
      %s184 = sphi 0, %s183
      %s200 = sphi 0, %s184
    $region4: #{tpu_custom_call.1} parent=1 // loop_header_branch
      %17 = sbr.rel (%p15) target = $region8
    $region5: #{tpu_custom_call.1} parent=1 // loop_body
      %s19 = ssub.s32 %s14, 1
      %s20 = ssub.s32 %s14, 2
      %s27 = sadd.s32 1, %s22
      %p28 = scmp.ge.s32.totalorder %s27, 4
      %s29 = scalar_select %p28, 0, %s27
      %s30 = sadd.s32 1, %s21
      %s31 = scalar_select %p28, %s30, %s21
      %p32 = scmp.ge.s32.totalorder %s31, 2
      %s33 = scalar_select %p32, 0, %s31
      %s34 = ssub.s32 %s21, %s33
      %s35 = ssub.s32 %s22, %s29
      %s36 = sor.u32 %s34, %s35
      %p37 = scmp.eq.s32.totalorder %s36, 0
      %s39 = sadd.s32 %s38, 1
      %s40 = scalar_select %p37, %s38, %s39
      %p43 = pneg %p37
      %p44 = scmp.eq.s32.totalorder %s14, 7
      %p45 = por %p43, %p44
      %p46 = scmp.ne.s32.totalorder %s38, %s41
      %p47 = scmp.eq.s32.totalorder %s14, 0
      %p48 = por %p46, %p47
      %p49 = scmp.ne.s32.totalorder %s38, %s41
      %p50 = scmp.eq.s32.totalorder %s19, 7
      %p51 = por %p49, %p50
      %p52 = scmp.ne.s32.totalorder %s41, %s42
      %p53 = scmp.eq.s32.totalorder %s19, 0
      %p54 = por %p52, %p53
      %p55 = scmp.ne.s32.totalorder %s41, %s42
      %p56 = scmp.eq.s32.totalorder %s20, 7
      %p57 = por %p55, %p56
      %p59 = scmp.ne.s32.totalorder %s42, %s58
      %p60 = scmp.eq.s32.totalorder %s20, 0
      %p61 = por %p59, %p60
      %s62 = smul.u32 %s22, 4
      %s63 = ssub.s32 %s62, 1
      %p64 = scmp.gt.s32.totalorder %s63, 0
      %s65 = scalar_select %p64, %s63, 0
      %s66 = smul.u32 %s29, 4
      %s67 = ssub.s32 %s66, 1
      %p68 = scmp.gt.s32.totalorder %s67, 0
      %s69 = scalar_select %p68, %s67, 0
      %s70 = ssub.s32 %s21, %s33
      %s71 = ssub.s32 %s65, %s69
      %s72 = sor.u32 %s70, %s71
      %p73 = scmp.eq.s32.totalorder %s72, 0
      %s75 = sadd.s32 %s74, 1
      %s76 = scalar_select %p73, %s74, %s75
      %p79 = pneg %p73
      %p80 = scmp.eq.s32.totalorder %s14, 7
      %p81 = por %p79, %p80
      %p82 = scmp.ne.s32.totalorder %s74, %s77
      %p83 = scmp.eq.s32.totalorder %s14, 0
      %p84 = por %p82, %p83
      %p85 = scmp.ne.s32.totalorder %s74, %s77
      %p86 = scmp.eq.s32.totalorder %s19, 7
      %p87 = por %p85, %p86
      %p88 = scmp.ne.s32.totalorder %s77, %s78
      %p89 = scmp.eq.s32.totalorder %s19, 0
      %p90 = por %p88, %p89
      %p91 = scmp.ne.s32.totalorder %s77, %s78
      %p92 = scmp.eq.s32.totalorder %s20, 7
      %p93 = por %p91, %p92
      %p95 = scmp.ne.s32.totalorder %s78, %s94
      %p96 = scmp.eq.s32.totalorder %s20, 0
      %p97 = por %p95, %p96
      %s98 = sadd.s32 %s22, 1
      %s99 = smul.u32 %s98, 4
      %p100 = scmp.lt.s32.totalorder %s99, 15
      %s101 = scalar_select %p100, %s99, 15
      %s102 = sadd.s32 %s29, 1
      %s103 = smul.u32 %s102, 4
      %p104 = scmp.lt.s32.totalorder %s103, 15
      %s105 = scalar_select %p104, %s103, 15
      %s106 = ssub.s32 %s21, %s33
      %s107 = ssub.s32 %s101, %s105
      %s108 = sor.u32 %s106, %s107
      %p109 = scmp.eq.s32.totalorder %s108, 0
      %s111 = sadd.s32 %s110, 1
      %s112 = scalar_select %p109, %s110, %s111
      %p115 = pneg %p109
      %p116 = scmp.eq.s32.totalorder %s14, 7
      %p117 = por %p115, %p116
      %p118 = scmp.ne.s32.totalorder %s110, %s113
      %p119 = scmp.eq.s32.totalorder %s14, 0
      %p120 = por %p118, %p119
      %p121 = scmp.ne.s32.totalorder %s110, %s113
      %p122 = scmp.eq.s32.totalorder %s19, 7
      %p123 = por %p121, %p122
      %p124 = scmp.ne.s32.totalorder %s113, %s114
      %p125 = scmp.eq.s32.totalorder %s19, 0
      %p126 = por %p124, %p125
      %p127 = scmp.ne.s32.totalorder %s113, %s114
      %p128 = scmp.eq.s32.totalorder %s20, 7
      %p129 = por %p127, %p128
      %p131 = scmp.ne.s32.totalorder %s114, %s130
      %p132 = scmp.eq.s32.totalorder %s20, 0
      %p133 = por %p131, %p132
      %s135 = sadd.s32 %s134, 1
      %p138 = scmp.eq.s32.totalorder %s14, 7
      %p139 = scmp.ne.s32.totalorder %s134, %s136
      %p140 = scmp.eq.s32.totalorder %s14, 0
      %p141 = por %p139, %p140
      %p142 = scmp.ne.s32.totalorder %s134, %s136
      %p143 = scmp.eq.s32.totalorder %s19, 7
      %p144 = por %p142, %p143
      %p145 = scmp.ne.s32.totalorder %s136, %s137
      %p146 = scmp.eq.s32.totalorder %s19, 0
      %p147 = por %p145, %p146
      %p148 = scmp.ne.s32.totalorder %s136, %s137
      %p149 = scmp.eq.s32.totalorder %s20, 7
      %p150 = por %p148, %p149
      %p152 = scmp.ne.s32.totalorder %s137, %s151
      %p153 = scmp.eq.s32.totalorder %s20, 0
      %p154 = por %p152, %p153
      %s156 = sadd.s32 %s155, 1
      %p159 = scmp.eq.s32.totalorder %s14, 7
      %p160 = scmp.ne.s32.totalorder %s155, %s157
      %p161 = scmp.eq.s32.totalorder %s14, 0
      %p162 = por %p160, %p161
      %p163 = scmp.ne.s32.totalorder %s155, %s157
      %p164 = scmp.eq.s32.totalorder %s19, 7
      %p165 = por %p163, %p164
      %p166 = scmp.ne.s32.totalorder %s157, %s158
      %p167 = scmp.eq.s32.totalorder %s19, 0
      %p168 = por %p166, %p167
      %p169 = scmp.ne.s32.totalorder %s157, %s158
      %p170 = scmp.eq.s32.totalorder %s20, 7
      %p171 = por %p169, %p170
      %p173 = scmp.ne.s32.totalorder %s158, %s172
      %p174 = scmp.eq.s32.totalorder %s20, 0
      %p175 = por %p173, %p174
      %s176 = ssub.s32 %s21, %s33
      %s177 = ssub.s32 %s22, %s29
      %s178 = sor.u32 %s176, %s177
      %p179 = scmp.eq.s32.totalorder %s178, 0
      %s181 = sadd.s32 %s180, 1
      %s182 = scalar_select %p179, %s180, %s181
      %p185 = pneg %p179
      %p186 = scmp.eq.s32.totalorder %s14, 7
      %p187 = por %p185, %p186
      %p188 = scmp.ne.s32.totalorder %s180, %s183
      %p189 = scmp.eq.s32.totalorder %s14, 0
      %p190 = por %p188, %p189
      %p191 = scmp.ne.s32.totalorder %s180, %s183
      %p192 = scmp.eq.s32.totalorder %s19, 7
      %p193 = por %p191, %p192
      %p194 = scmp.ne.s32.totalorder %s183, %s184
      %p195 = scmp.eq.s32.totalorder %s19, 0
      %p196 = por %p194, %p195
      %p197 = scmp.ne.s32.totalorder %s183, %s184
      %p198 = scmp.eq.s32.totalorder %s20, 7
      %p199 = por %p197, %p198
      %p201 = scmp.ne.s32.totalorder %s184, %s200
      %p202 = scmp.eq.s32.totalorder %s20, 0
      %p203 = por %p201, %p202
      %p204 = scmp.le.s32.totalorder 1, %s14
      %p205 = scmp.lt.s32.totalorder %s14, 9
      %p206 = pnand %p204, %p205
      %p207 = pneg %p206
      // Predicated region
      $region9: #{tpu_custom_call.1} parent=5 // pred_check
        _
      $region10: #{tpu_custom_call.1} parent=5 // pred_check_branch
        %209 = sbr.rel (%p206) target = $region12
      $region11: #{tpu_custom_call.1} parent=5 // pred_region
        %s210 = ssub.s32 %s14, 1
        // Predicated region
        $region13: #{tpu_custom_call.1} parent=11 // pred_check
          %p211 = pneg %p147
        $region14: #{tpu_custom_call.1} parent=11 // pred_check_branch
          %213 = sbr.rel (%p211) target = $region16
        $region15: #{tpu_custom_call.1} parent=11 // pred_region
          _
        $region16: #{tpu_custom_call.1} parent=11 // pred_fallthru
          _
        // Predicated region
        $region17: #{tpu_custom_call.1} parent=11 // pred_check
          %p214 = pneg %p168
        $region18: #{tpu_custom_call.1} parent=11 // pred_check_branch
          %216 = sbr.rel (%p214) target = $region20
        $region19: #{tpu_custom_call.1} parent=11 // pred_region
          _
        $region20: #{tpu_custom_call.1} parent=11 // pred_fallthru
          _
      $region12: #{tpu_custom_call.1} parent=5 // pred_fallthru
        _
      %p217 = scmp.lt.s32.totalorder %s14, 8
      // Predicated region
      $region21: #{tpu_custom_call.1} parent=5 // pred_check
        %p218 = pneg %p217
      $region22: #{tpu_custom_call.1} parent=5 // pred_check_branch
        %220 = sbr.rel (%p218) target = $region24
      $region23: #{tpu_custom_call.1} parent=5 // pred_region
        // Predicated region
        $region25: #{tpu_custom_call.1} parent=23 // pred_check
          %p221 = pneg %p48
        $region26: #{tpu_custom_call.1} parent=23 // pred_check_branch
          %223 = sbr.rel (%p221) target = $region28
        $region27: #{tpu_custom_call.1} parent=23 // pred_region
          %s224 = smul.u32 4, %s22
          %p225 = scmp.lt.s32.totalorder %s21, 1
          %s226 = scalar_select %p225, %s21, 1
          %p227 = scmp.lt.s32.totalorder %s224, 15
          %s228 = scalar_select %p227, %s224, 15
          %s229 = smul.addr %s228, 2
          %s230 = smul.addr %s226, 32
          %s231 = sadd.s32 %s229, %s230
          %s232 = smul.addr %s231, 4
          %s233 = scalar_lea.vmem %s0, %s232
          %s234 = smul.u32 4, %s22
        $region28: #{tpu_custom_call.1} parent=23 // pred_fallthru
          _
        // Predicated region
        $region29: #{tpu_custom_call.1} parent=23 // pred_check
          %p235 = pneg %p84
        $region30: #{tpu_custom_call.1} parent=23 // pred_check_branch
          %237 = sbr.rel (%p235) target = $region32
        $region31: #{tpu_custom_call.1} parent=23 // pred_region
          %s238 = smul.u32 %s22, 4
          %s239 = ssub.s32 %s238, 1
          %p240 = scmp.gt.s32.totalorder %s239, 0
          %s241 = scalar_select %p240, %s239, 0
          %p242 = scmp.lt.s32.totalorder %s21, 1
          %s243 = scalar_select %p242, %s21, 1
          %p244 = scmp.lt.s32.totalorder %s241, 15
          %s245 = scalar_select %p244, %s241, 15
          %s246 = smul.addr %s245, 2
          %s247 = smul.addr %s243, 32
          %s248 = sadd.s32 %s246, %s247
          %s249 = smul.addr %s248, 4
          %s250 = scalar_lea.vmem %s1, %s249
          %s251 = smul.u32 %s22, 4
          %s252 = ssub.s32 %s251, 1
          %p253 = scmp.gt.s32.totalorder %s252, 0
          %s254 = scalar_select %p253, %s252, 0
        $region32: #{tpu_custom_call.1} parent=23 // pred_fallthru
          _
        // Predicated region
        $region33: #{tpu_custom_call.1} parent=23 // pred_check
          %p255 = pneg %p120
        $region34: #{tpu_custom_call.1} parent=23 // pred_check_branch
          %257 = sbr.rel (%p255) target = $region36
        $region35: #{tpu_custom_call.1} parent=23 // pred_region
          %s258 = sadd.s32 %s22, 1
          %s259 = smul.u32 %s258, 4
          %p260 = scmp.lt.s32.totalorder %s259, 15
          %s261 = scalar_select %p260, %s259, 15
          %p262 = scmp.lt.s32.totalorder %s21, 1
          %s263 = scalar_select %p262, %s21, 1
          %p264 = scmp.lt.s32.totalorder %s261, 15
          %s265 = scalar_select %p264, %s261, 15
          %s266 = smul.addr %s265, 2
          %s267 = smul.addr %s263, 32
          %s268 = sadd.s32 %s266, %s267
          %s269 = smul.addr %s268, 4
          %s270 = scalar_lea.vmem %s2, %s269
          %s271 = sadd.s32 %s22, 1
          %s272 = smul.u32 %s271, 4
          %p273 = scmp.lt.s32.totalorder %s272, 15
          %s274 = scalar_select %p273, %s272, 15
        $region36: #{tpu_custom_call.1} parent=23 // pred_fallthru
          _
      $region24: #{tpu_custom_call.1} parent=5 // pred_fallthru
        _
      %p275 = scmp.le.s32.totalorder 1, %s14
      %p276 = scmp.lt.s32.totalorder %s14, 9
      %p277 = pnand %p275, %p276
      %p278 = pneg %p277
      // Predicated region
      $region37: #{tpu_custom_call.1} parent=5 // pred_check
        _
      $region38: #{tpu_custom_call.1} parent=5 // pred_check_branch
        %280 = sbr.rel (%p277) target = $region40
      $region39: #{tpu_custom_call.1} parent=5 // pred_region
        %s281 = ssub.s32 %s14, 1
        %s282 = smul.u32 4, %s24
        %p283 = scmp.lt.s32.totalorder %s23, 1
        %s284 = scalar_select %p283, %s23, 1
        %p285 = scmp.lt.s32.totalorder %s282, 15
        %s286 = scalar_select %p285, %s282, 15
        %s287 = smul.addr %s286, 2
        %s288 = smul.addr %s284, 32
        %s289 = sadd.s32 %s287, %s288
        %s290 = smul.addr %s289, 4
        %s291 = scalar_lea.vmem %s0, %s290
        %p292 = pneg %p54
        %p293 = pneg %p51
        %s294 = smul.u32 %s24, 4
        %s295 = ssub.s32 %s294, 1
        %p296 = scmp.gt.s32.totalorder %s295, 0
        %s297 = scalar_select %p296, %s295, 0
        %p298 = scmp.lt.s32.totalorder %s23, 1
        %s299 = scalar_select %p298, %s23, 1
        %p300 = scmp.lt.s32.totalorder %s297, 15
        %s301 = scalar_select %p300, %s297, 15
        %s302 = smul.addr %s301, 2
        %s303 = smul.addr %s299, 32
        %s304 = sadd.s32 %s302, %s303
        %s305 = smul.addr %s304, 4
        %s306 = scalar_lea.vmem %s1, %s305
        %p307 = pneg %p90
        %p308 = pneg %p87
        %s309 = sadd.s32 %s24, 1
        %s310 = smul.u32 %s309, 4
        %p311 = scmp.lt.s32.totalorder %s310, 15
        %s312 = scalar_select %p311, %s310, 15
        %p313 = scmp.lt.s32.totalorder %s23, 1
        %s314 = scalar_select %p313, %s23, 1
        %p315 = scmp.lt.s32.totalorder %s312, 15
        %s316 = scalar_select %p315, %s312, 15
        %s317 = smul.addr %s316, 2
        %s318 = smul.addr %s314, 32
        %s319 = sadd.s32 %s317, %s318
        %s320 = smul.addr %s319, 4
        %s321 = scalar_lea.vmem %s2, %s320
        %p322 = pneg %p126
        %p323 = pneg %p123
        %p324 = pneg %p147
        %p325 = pneg %p144
        %p326 = pneg %p168
        %p327 = pneg %p165
        %p328 = pneg %p196
        %p329 = pneg %p193
        %s330 = sand.u32 %s183, 1
        %s331 = scalar_lea.sflag [#allocation4], %s330
        %s332 = sand.u32 %s183, 1
        %s333 = smul.addr %s332, 64
        %s334 = scalar_lea.vmem [#allocation3], %s333
        %s335 = smul.u32 4, %s24
        %p336 = scmp.lt.s32.totalorder %s23, 1
        %s337 = scalar_select %p336, %s23, 1
        %p338 = scmp.lt.s32.totalorder %s335, 15
        %s339 = scalar_select %p338, %s335, 15
        %s340 = smul.addr %s339, 2
        %s341 = smul.addr %s337, 32
        %s342 = sadd.s32 %s340, %s341
        %s343 = smul.addr %s342, 4
        %s344 = scalar_lea.vmem %s0, %s343
        %s345 = smul.u32 4, %s24
        %s346 = smul.u32 %s24, 4
        %s347 = ssub.s32 %s346, 1
        %p348 = scmp.gt.s32.totalorder %s347, 0
        %s349 = scalar_select %p348, %s347, 0
        %p350 = scmp.lt.s32.totalorder %s23, 1
        %s351 = scalar_select %p350, %s23, 1
        %p352 = scmp.lt.s32.totalorder %s349, 15
        %s353 = scalar_select %p352, %s349, 15
        %s354 = smul.addr %s353, 2
        %s355 = smul.addr %s351, 32
        %s356 = sadd.s32 %s354, %s355
        %s357 = smul.addr %s356, 4
        %s358 = scalar_lea.vmem %s1, %s357
        %s359 = smul.u32 %s24, 4
        %s360 = ssub.s32 %s359, 1
        %p361 = scmp.gt.s32.totalorder %s360, 0
        %s362 = scalar_select %p361, %s360, 0
        %s363 = sadd.s32 %s24, 1
        %s364 = smul.u32 %s363, 4
        %p365 = scmp.lt.s32.totalorder %s364, 15
        %s366 = scalar_select %p365, %s364, 15
        %p367 = scmp.lt.s32.totalorder %s23, 1
        %s368 = scalar_select %p367, %s23, 1
        %p369 = scmp.lt.s32.totalorder %s366, 15
        %s370 = scalar_select %p369, %s366, 15
        %s371 = smul.addr %s370, 2
        %s372 = smul.addr %s368, 32
        %s373 = sadd.s32 %s371, %s372
        %s374 = smul.addr %s373, 4
        %s375 = scalar_lea.vmem %s2, %s374
        %s376 = sadd.s32 %s24, 1
        %s377 = smul.u32 %s376, 4
        %p378 = scmp.lt.s32.totalorder %s377, 15
        %s379 = scalar_select %p378, %s377, 15
        %s380 = smul.u32 4, %s24
        %p382 = scmp.eq.s32.totalorder %s24, 0
        %v383 = vld [vmem:[%s358] sm:$0xf]
        %v384 = vld [vmem:[%s358 + $0x4] sm:$0xf]
        %s385 = scalar_select %p382, 1, 0
        %v386 = vstv %s385
        %vm387 = vcmp.eq.s32.totalorder %v386, 1
        %v388 = vsel %vm387, 0, %v383
        %v389 = vsel %vm387, 0, %v384
        %p390 = scmp.eq.s32.totalorder %s24, 3
        %v391 = vld [vmem:[%s375] sm:$0xf]
        %v392 = vld [vmem:[%s375 + $0x4] sm:$0xf]
        %s393 = scalar_select %p390, 1, 0
        %v394 = vstv %s393
        %vm395 = vcmp.eq.s32.totalorder %v394, 1
        %v396 = vsel %vm395, 0, %v391
        %v397 = vsel %vm395, 0, %v392
        %v400 = vunpack.c.l.b16 %v388
        %v401 = vunpack.c.l.b16 %v389
        %v402 = vpack.c.b16 %v401, %v400
        %vm404 = vcmask 31744
        %405 = vst.msk [vmem:[#allocation2] sm:$0xff] %vm404, %v402
        %v406 = vld [vmem:[%s344] sm:$0xf]
        %v407 = vld [vmem:[%s344 + $0x4] sm:$0xf]
        %v408 = vld [vmem:[%s344 + $0x8] sm:$0xf]
        %v409 = vld [vmem:[%s344 + $0xc] sm:$0xf]
        %v410 = vld [vmem:[%s344 + $0x10] sm:$0xf]
        %v411 = vld [vmem:[%s344 + $0x14] sm:$0xf]
        %v412 = vld [vmem:[%s344 + $0x18] sm:$0xf]
        %v413 = vld [vmem:[%s344 + $0x1c] sm:$0xf]
        %v422 = vunpack.c.l.b16 %v406
        %v423 = vunpack.c.l.b16 %v407
        %v424 = vunpack.c.l.b16 %v408
        %v425 = vunpack.c.l.b16 %v409
        %v426 = vunpack.c.l.b16 %v410
        %v427 = vunpack.c.l.b16 %v411
        %v428 = vunpack.c.l.b16 %v412
        %v429 = vunpack.c.l.b16 %v413
        %v430 = vpack.c.b16 %v423, %v422
        %v431 = vpack.c.b16 %v425, %v424
        %v432 = vpack.c.b16 %v427, %v426
        %v433 = vpack.c.b16 %v429, %v428
        %s438 = scalar_lea.vmem [#allocation2], 8
        %439 = vst.msk [vmem:[%s438] sm:$0xff] %vm404, %v430
        %440 = vst.msk [vmem:[%s438 + $0x8] sm:$0xff] %vm404, %v431
        %441 = vst.msk [vmem:[%s438 + $0x10] sm:$0xff] %vm404, %v432
        %442 = vst.msk [vmem:[%s438 + $0x18] sm:$0xff] %vm404, %v433
        %v445 = vunpack.c.l.b16 %v396
        %v446 = vunpack.c.l.b16 %v397
        %v447 = vpack.c.b16 %v446, %v445
        %s449 = scalar_lea.vmem [#allocation2], 40
        %450 = vst.msk [vmem:[%s449] sm:$0xff] %vm404, %v447
        %v451 = vld [vmem:[#allocation2] sm:$0xff]
        %v452 = vld [vmem:[#allocation2 + $0x8] sm:$0xff]
        %v453 = vld [vmem:[#allocation2 + $0x10] sm:$0xff]
        %v454 = vld [vmem:[#allocation2 + $0x18] sm:$0xff]
        %v455 = vld [vmem:[%s3] sm:$0x3f]
        %v456 = vld [vmem:[%s438] sm:$0xff]
        %v457 = vld [vmem:[%s438 + $0x8] sm:$0xff]
        %v458 = vld [vmem:[%s438 + $0x10] sm:$0xff]
        %v459 = vld [vmem:[%s438 + $0x18] sm:$0xff]
        %s460 = scalar_lea.vmem %s3, 6
        %v461 = vld [vmem:[%s460] sm:$0x3f]
        %v463 = vcombine.high %v461, %v461
        %v465 = vunpack.c.l.s4 1983009808
        %v466 = vunpack.c.0.s8 %v465
        %v467 = vlaneseq
        %v468 = vshrl.u32 %v467, 7
        %v469 = vsub.s32 %v466, %v468
        %v470 = vrot.slane %v461, %v469
        %v472 = vunpack.c.l.s4 1983009808
        %v473 = vunpack.c.0.s8 %v472
        %v474 = vlaneseq
        %v475 = vshrl.u32 %v474, 7
        %v476 = vsub.s32 %v473, %v475
        %v477 = vrot.slane %v463, %v476
        %v478 = vcombine.high %v470, %v470
        %v480 = vsel %vm404, %v456, 0
        %v483 = vsel %vm404, %v457, 0
        %v486 = vsel %vm404, %v458, 0
        %v489 = vsel %vm404, %v459, 0
        %vm491 = vcmask 1041408
        %v493 = vsel %vm491, %v470, 0
        %v496 = vsel %vm491, %v478, 0
        %v499 = vsel %vm491, %v477, 0
        %501 = vmatprep.subr.bf16.mxu0 %v496
        %502 = vmatpush1.bf16.msra.mxu0 %v493
        %503 = vmatprep.subr.bf16.mxu0 0
        %504 = vmatpush1.bf16.msra.mxu0 0
        %505 = vmatprep.subr.bf16.mxu0 0
        %506 = vmatpush1.bf16.msra.mxu0 0
        %507 = vmatprep.subr.bf16.mxu0 0
        %508 = vmatpush1.bf16.msra.mxu0 0
        %509 = vmatprep.subr.bf16.mxu0 0
        %510 = vmatpush1.bf16.msra.mxu0 0
        %511 = vmatprep.subr.bf16.mxu0 0
        %512 = vmatpush1.bf16.msra.mxu0 0
        %513 = vmatprep.subr.bf16.mxu0 0
        %514 = vmatpush1.bf16.msra.mxu0 0
        %515 = vmatprep.subr.bf16.mxu0 0
        %516 = vmatpush1.bf16.msra.mxu0 0
        %517 = vmatprep.subr.bf16.mxu0 0
        %518 = vmatpush1.bf16.msra.mxu0 0
        %519 = vmatprep.subr.bf16.mxu0 0
        %520 = vmatpush1.bf16.msra.mxu0 0
        %521 = vmatprep.subr.bf16.mxu0 0
        %522 = vmatpush1.bf16.msra.mxu0 0
        %523 = vmatprep.subr.bf16.mxu0 0
        %524 = vmatpush1.bf16.msra.mxu0 0
        %525 = vmatprep.subr.bf16.mxu0 0
        %526 = vmatpush1.bf16.msra.mxu0 0
        %527 = vmatprep.subr.bf16.mxu0 0
        %528 = vmatpush1.bf16.msra.mxu0 0
        %529 = vmatprep.subr.bf16.mxu0 0
        %530 = vmatpush1.bf16.msra.mxu0 0
        %531 = vmatprep.subr.bf16.mxu0 0
        %532 = vmatpush1.bf16.msra.mxu0 0
        %533 = vmatprep.mubr.bf16.mxu0 0
        %534 = vmatmul.mubr.bf16.gmra.mrb[0].mxu0 %v480
        %v535 = vpop.f32.mrb[0].mxu0
        %v536 = vadd.f32 0.0, %v535
        %v537 = vpop.f32.mrb[0].mxu0
        %v538 = vadd.f32 0.0, %v537
        %v539 = vpop.f32.mrb[0].mxu0
        %v540 = vadd.f32 0.0, %v539
        %v541 = vpop.f32.mrb[0].mxu0
        %v542 = vadd.f32 0.0, %v541
        %543 = vmatprep.mubr.bf16.mxu0 0
        %544 = vmatmul.mubr.bf16.gmra.mrb[0].mxu0 %v483
        %v545 = vpop.f32.mrb[0].mxu0
        %v546 = vadd.f32 0.0, %v545
        %v547 = vpop.f32.mrb[0].mxu0
        %v548 = vadd.f32 0.0, %v547
        %v549 = vpop.f32.mrb[0].mxu0
        %v550 = vadd.f32 0.0, %v549
        %v551 = vpop.f32.mrb[0].mxu0
        %v552 = vadd.f32 0.0, %v551
        %553 = vmatprep.mubr.bf16.mxu0 0
        %554 = vmatmul.mubr.bf16.gmra.mrb[0].mxu0 %v486
        %v555 = vpop.f32.mrb[0].mxu0
        %v556 = vadd.f32 0.0, %v555
        %v557 = vpop.f32.mrb[0].mxu0
        %v558 = vadd.f32 0.0, %v557
        %v559 = vpop.f32.mrb[0].mxu0
        %v560 = vadd.f32 0.0, %v559
        %v561 = vpop.f32.mrb[0].mxu0
        %v562 = vadd.f32 0.0, %v561
        %563 = vmatprep.mubr.bf16.mxu0 0
        %564 = vmatmul.mubr.bf16.gmra.mrb[0].mxu0 %v489
        %v565 = vpop.f32.mrb[0].mxu0
        %v566 = vadd.f32 0.0, %v565
        %v567 = vpop.f32.mrb[0].mxu0
        %v568 = vadd.f32 0.0, %v567
        %v569 = vpop.f32.mrb[0].mxu0
        %v570 = vadd.f32 0.0, %v569
        %v571 = vpop.f32.mrb[0].mxu0
        %v572 = vadd.f32 0.0, %v571
        %573 = vdwg.mxu0
        %574 = vmatprep.subr.bf16.mxu0 0
        %575 = vmatpush1.bf16.msra.mxu0 %v499
        %576 = vmatprep.subr.bf16.mxu0 0
        %577 = vmatpush1.bf16.msra.mxu0 0
        %578 = vmatprep.subr.bf16.mxu0 0
        %579 = vmatpush1.bf16.msra.mxu0 0
        %580 = vmatprep.subr.bf16.mxu0 0
        %581 = vmatpush1.bf16.msra.mxu0 0
        %582 = vmatprep.subr.bf16.mxu0 0
        %583 = vmatpush1.bf16.msra.mxu0 0
        %584 = vmatprep.subr.bf16.mxu0 0
        %585 = vmatpush1.bf16.msra.mxu0 0
        %586 = vmatprep.subr.bf16.mxu0 0
        %587 = vmatpush1.bf16.msra.mxu0 0
        %588 = vmatprep.subr.bf16.mxu0 0
        %589 = vmatpush1.bf16.msra.mxu0 0
        %590 = vmatprep.subr.bf16.mxu0 0
        %591 = vmatpush1.bf16.msra.mxu0 0
        %592 = vmatprep.subr.bf16.mxu0 0
        %593 = vmatpush1.bf16.msra.mxu0 0
        %594 = vmatprep.subr.bf16.mxu0 0
        %595 = vmatpush1.bf16.msra.mxu0 0
        %596 = vmatprep.subr.bf16.mxu0 0
        %597 = vmatpush1.bf16.msra.mxu0 0
        %598 = vmatprep.subr.bf16.mxu0 0
        %599 = vmatpush1.bf16.msra.mxu0 0
        %600 = vmatprep.subr.bf16.mxu0 0
        %601 = vmatpush1.bf16.msra.mxu0 0
        %602 = vmatprep.subr.bf16.mxu0 0
        %603 = vmatpush1.bf16.msra.mxu0 0
        %604 = vmatprep.subr.bf16.mxu0 0
        %605 = vmatpush1.bf16.msra.mxu0 0
        %606 = vmatprep.mubr.bf16.mxu0 0
        %607 = vmatmul.mubr.bf16.gmra.mrb[0].mxu0 %v480
        %v608 = vpop.f32.mrb[0].mxu0
        %v609 = vadd.f32 0.0, %v608
        %v610 = vpop.f32.mrb[0].mxu0
        %v611 = vpop.f32.mrb[0].mxu0
        %v612 = vadd.f32 0.0, %v611
        %v613 = vpop.f32.mrb[0].mxu0
        %614 = vmatprep.mubr.bf16.mxu0 0
        %615 = vmatmul.mubr.bf16.gmra.mrb[0].mxu0 %v483
        %v616 = vpop.f32.mrb[0].mxu0
        %v617 = vadd.f32 0.0, %v616
        %v618 = vpop.f32.mrb[0].mxu0
        %v619 = vpop.f32.mrb[0].mxu0
        %v620 = vadd.f32 0.0, %v619
        %v621 = vpop.f32.mrb[0].mxu0
        %622 = vmatprep.mubr.bf16.mxu0 0
        %623 = vmatmul.mubr.bf16.gmra.mrb[0].mxu0 %v486
        %v624 = vpop.f32.mrb[0].mxu0
        %v625 = vadd.f32 0.0, %v624
        %v626 = vpop.f32.mrb[0].mxu0
        %v627 = vpop.f32.mrb[0].mxu0
        %v628 = vadd.f32 0.0, %v627
        %v629 = vpop.f32.mrb[0].mxu0
        %630 = vmatprep.mubr.bf16.mxu0 0
        %631 = vmatmul.mubr.bf16.gmra.mrb[0].mxu0 %v489
        %v632 = vpop.f32.mrb[0].mxu0
        %v633 = vadd.f32 0.0, %v632
        %v634 = vpop.f32.mrb[0].mxu0
        %v635 = vpop.f32.mrb[0].mxu0
        %v636 = vadd.f32 0.0, %v635
        %v637 = vpop.f32.mrb[0].mxu0
        %638 = vdwg.mxu0
        %v640 = vcombine.high %v455, %v455
        %v642 = vunpack.c.l.s4 1983009808
        %v643 = vunpack.c.0.s8 %v642
        %v644 = vlaneseq
        %v645 = vshrl.u32 %v644, 7
        %v646 = vsub.s32 %v643, %v645
        %v647 = vrot.slane %v455, %v646
        %v649 = vunpack.c.l.s4 1983009808
        %v650 = vunpack.c.0.s8 %v649
        %v651 = vlaneseq
        %v652 = vshrl.u32 %v651, 7
        %v653 = vsub.s32 %v650, %v652
        %v654 = vrot.slane %v640, %v653
        %v655 = vcombine.high %v647, %v647
        %v657 = vsel %vm404, %v451, 0
        %v660 = vsel %vm404, %v452, 0
        %v663 = vsel %vm404, %v453, 0
        %v666 = vsel %vm404, %v454, 0
        %v669 = vsel %vm491, %v647, 0
        %v672 = vsel %vm491, %v655, 0
        %v675 = vsel %vm491, %v654, 0
        %677 = vmatprep.subr.bf16.mxu0 %v672
        %678 = vmatpush1.bf16.msra.mxu0 %v669
        %679 = vmatprep.subr.bf16.mxu0 0
        %680 = vmatpush1.bf16.msra.mxu0 0
        %681 = vmatprep.subr.bf16.mxu0 0
        %682 = vmatpush1.bf16.msra.mxu0 0
        %683 = vmatprep.subr.bf16.mxu0 0
        %684 = vmatpush1.bf16.msra.mxu0 0
        %685 = vmatprep.subr.bf16.mxu0 0
        %686 = vmatpush1.bf16.msra.mxu0 0
        %687 = vmatprep.subr.bf16.mxu0 0
        %688 = vmatpush1.bf16.msra.mxu0 0
        %689 = vmatprep.subr.bf16.mxu0 0
        %690 = vmatpush1.bf16.msra.mxu0 0
        %691 = vmatprep.subr.bf16.mxu0 0
        %692 = vmatpush1.bf16.msra.mxu0 0
        %693 = vmatprep.subr.bf16.mxu0 0
        %694 = vmatpush1.bf16.msra.mxu0 0
        %695 = vmatprep.subr.bf16.mxu0 0
        %696 = vmatpush1.bf16.msra.mxu0 0
        %697 = vmatprep.subr.bf16.mxu0 0
        %698 = vmatpush1.bf16.msra.mxu0 0
        %699 = vmatprep.subr.bf16.mxu0 0
        %700 = vmatpush1.bf16.msra.mxu0 0
        %701 = vmatprep.subr.bf16.mxu0 0
        %702 = vmatpush1.bf16.msra.mxu0 0
        %703 = vmatprep.subr.bf16.mxu0 0
        %704 = vmatpush1.bf16.msra.mxu0 0
        %705 = vmatprep.subr.bf16.mxu0 0
        %706 = vmatpush1.bf16.msra.mxu0 0
        %707 = vmatprep.subr.bf16.mxu0 0
        %708 = vmatpush1.bf16.msra.mxu0 0
        %709 = vmatprep.mubr.bf16.mxu0 0
        %710 = vmatmul.mubr.bf16.gmra.mrb[0].mxu0 %v657
        %v711 = vpop.f32.mrb[0].mxu0
        %v712 = vadd.f32 %v536, %v711
        %v713 = vpop.f32.mrb[0].mxu0
        %v714 = vadd.f32 %v538, %v713
        %v715 = vpop.f32.mrb[0].mxu0
        %v716 = vadd.f32 %v540, %v715
        %v717 = vpop.f32.mrb[0].mxu0
        %v718 = vadd.f32 %v542, %v717
        %719 = vmatprep.mubr.bf16.mxu0 0
        %720 = vmatmul.mubr.bf16.gmra.mrb[0].mxu0 %v660
        %v721 = vpop.f32.mrb[0].mxu0
        %v722 = vadd.f32 %v546, %v721
        %v723 = vpop.f32.mrb[0].mxu0
        %v724 = vadd.f32 %v548, %v723
        %v725 = vpop.f32.mrb[0].mxu0
        %v726 = vadd.f32 %v550, %v725
        %v727 = vpop.f32.mrb[0].mxu0
        %v728 = vadd.f32 %v552, %v727
        %729 = vmatprep.mubr.bf16.mxu0 0
        %730 = vmatmul.mubr.bf16.gmra.mrb[0].mxu0 %v663
        %v731 = vpop.f32.mrb[0].mxu0
        %v732 = vadd.f32 %v556, %v731
        %v733 = vpop.f32.mrb[0].mxu0
        %v734 = vadd.f32 %v558, %v733
        %v735 = vpop.f32.mrb[0].mxu0
        %v736 = vadd.f32 %v560, %v735
        %v737 = vpop.f32.mrb[0].mxu0
        %v738 = vadd.f32 %v562, %v737
        %739 = vmatprep.mubr.bf16.mxu0 0
        %740 = vmatmul.mubr.bf16.gmra.mrb[0].mxu0 %v666
        %v741 = vpop.f32.mrb[0].mxu0
        %v742 = vadd.f32 %v566, %v741
        %v743 = vpop.f32.mrb[0].mxu0
        %v744 = vadd.f32 %v568, %v743
        %v745 = vpop.f32.mrb[0].mxu0
        %v746 = vadd.f32 %v570, %v745
        %v747 = vpop.f32.mrb[0].mxu0
        %v748 = vadd.f32 %v572, %v747
        %749 = vdwg.mxu0
        %750 = vmatprep.subr.bf16.mxu0 0
        %751 = vmatpush1.bf16.msra.mxu0 %v675
        %752 = vmatprep.subr.bf16.mxu0 0
        %753 = vmatpush1.bf16.msra.mxu0 0
        %754 = vmatprep.subr.bf16.mxu0 0
        %755 = vmatpush1.bf16.msra.mxu0 0
        %756 = vmatprep.subr.bf16.mxu0 0
        %757 = vmatpush1.bf16.msra.mxu0 0
        %758 = vmatprep.subr.bf16.mxu0 0
        %759 = vmatpush1.bf16.msra.mxu0 0
        %760 = vmatprep.subr.bf16.mxu0 0
        %761 = vmatpush1.bf16.msra.mxu0 0
        %762 = vmatprep.subr.bf16.mxu0 0
        %763 = vmatpush1.bf16.msra.mxu0 0
        %764 = vmatprep.subr.bf16.mxu0 0
        %765 = vmatpush1.bf16.msra.mxu0 0
        %766 = vmatprep.subr.bf16.mxu0 0
        %767 = vmatpush1.bf16.msra.mxu0 0
        %768 = vmatprep.subr.bf16.mxu0 0
        %769 = vmatpush1.bf16.msra.mxu0 0
        %770 = vmatprep.subr.bf16.mxu0 0
        %771 = vmatpush1.bf16.msra.mxu0 0
        %772 = vmatprep.subr.bf16.mxu0 0
        %773 = vmatpush1.bf16.msra.mxu0 0
        %774 = vmatprep.subr.bf16.mxu0 0
        %775 = vmatpush1.bf16.msra.mxu0 0
        %776 = vmatprep.subr.bf16.mxu0 0
        %777 = vmatpush1.bf16.msra.mxu0 0
        %778 = vmatprep.subr.bf16.mxu0 0
        %779 = vmatpush1.bf16.msra.mxu0 0
        %780 = vmatprep.subr.bf16.mxu0 0
        %781 = vmatpush1.bf16.msra.mxu0 0
        %782 = vmatprep.mubr.bf16.mxu0 0
        %783 = vmatmul.mubr.bf16.gmra.mrb[0].mxu0 %v657
        %v784 = vpop.f32.mrb[0].mxu0
        %v785 = vadd.f32 %v609, %v784
        %v786 = vpop.f32.mrb[0].mxu0
        %v787 = vpop.f32.mrb[0].mxu0
        %v788 = vadd.f32 %v612, %v787
        %v789 = vpop.f32.mrb[0].mxu0
        %790 = vmatprep.mubr.bf16.mxu0 0
        %791 = vmatmul.mubr.bf16.gmra.mrb[0].mxu0 %v660
        %v792 = vpop.f32.mrb[0].mxu0
        %v793 = vadd.f32 %v617, %v792
        %v794 = vpop.f32.mrb[0].mxu0
        %v795 = vpop.f32.mrb[0].mxu0
        %v796 = vadd.f32 %v620, %v795
        %v797 = vpop.f32.mrb[0].mxu0
        %798 = vmatprep.mubr.bf16.mxu0 0
        %799 = vmatmul.mubr.bf16.gmra.mrb[0].mxu0 %v663
        %v800 = vpop.f32.mrb[0].mxu0
        %v801 = vadd.f32 %v625, %v800
        %v802 = vpop.f32.mrb[0].mxu0
        %v803 = vpop.f32.mrb[0].mxu0
        %v804 = vadd.f32 %v628, %v803
        %v805 = vpop.f32.mrb[0].mxu0
        %806 = vmatprep.mubr.bf16.mxu0 0
        %807 = vmatmul.mubr.bf16.gmra.mrb[0].mxu0 %v666
        %v808 = vpop.f32.mrb[0].mxu0
        %v809 = vadd.f32 %v633, %v808
        %v810 = vpop.f32.mrb[0].mxu0
        %v811 = vpop.f32.mrb[0].mxu0
        %v812 = vadd.f32 %v636, %v811
        %v813 = vpop.f32.mrb[0].mxu0
        %814 = vdwg.mxu0
        %s815 = scalar_lea.vmem [#allocation2], 16
        %v816 = vld [vmem:[%s815] sm:$0xff]
        %v817 = vld [vmem:[%s815 + $0x8] sm:$0xff]
        %v818 = vld [vmem:[%s815 + $0x10] sm:$0xff]
        %v819 = vld [vmem:[%s815 + $0x18] sm:$0xff]
        %s820 = scalar_lea.vmem %s3, 12
        %v821 = vld [vmem:[%s820] sm:$0x3f]
        %v823 = vcombine.high %v821, %v821
        %v825 = vunpack.c.l.s4 1983009808
        %v826 = vunpack.c.0.s8 %v825
        %v827 = vlaneseq
        %v828 = vshrl.u32 %v827, 7
        %v829 = vsub.s32 %v826, %v828
        %v830 = vrot.slane %v821, %v829
        %v832 = vunpack.c.l.s4 1983009808
        %v833 = vunpack.c.0.s8 %v832
        %v834 = vlaneseq
        %v835 = vshrl.u32 %v834, 7
        %v836 = vsub.s32 %v833, %v835
        %v837 = vrot.slane %v823, %v836
        %v838 = vcombine.high %v830, %v830
        %v840 = vsel %vm404, %v816, 0
        %v843 = vsel %vm404, %v817, 0
        %v846 = vsel %vm404, %v818, 0
        %v849 = vsel %vm404, %v819, 0
        %v852 = vsel %vm491, %v830, 0
        %v855 = vsel %vm491, %v838, 0
        %v858 = vsel %vm491, %v837, 0
        %860 = vmatprep.subr.bf16.mxu0 %v855
        %861 = vmatpush1.bf16.msra.mxu0 %v852
        %862 = vmatprep.subr.bf16.mxu0 0
        %863 = vmatpush1.bf16.msra.mxu0 0
        %864 = vmatprep.subr.bf16.mxu0 0
        %865 = vmatpush1.bf16.msra.mxu0 0
        %866 = vmatprep.subr.bf16.mxu0 0
        %867 = vmatpush1.bf16.msra.mxu0 0
        %868 = vmatprep.subr.bf16.mxu0 0
        %869 = vmatpush1.bf16.msra.mxu0 0
        %870 = vmatprep.subr.bf16.mxu0 0
        %871 = vmatpush1.bf16.msra.mxu0 0
        %872 = vmatprep.subr.bf16.mxu0 0
        %873 = vmatpush1.bf16.msra.mxu0 0
        %874 = vmatprep.subr.bf16.mxu0 0
        %875 = vmatpush1.bf16.msra.mxu0 0
        %876 = vmatprep.subr.bf16.mxu0 0
        %877 = vmatpush1.bf16.msra.mxu0 0
        %878 = vmatprep.subr.bf16.mxu0 0
        %879 = vmatpush1.bf16.msra.mxu0 0
        %880 = vmatprep.subr.bf16.mxu0 0
        %881 = vmatpush1.bf16.msra.mxu0 0
        %882 = vmatprep.subr.bf16.mxu0 0
        %883 = vmatpush1.bf16.msra.mxu0 0
        %884 = vmatprep.subr.bf16.mxu0 0
        %885 = vmatpush1.bf16.msra.mxu0 0
        %886 = vmatprep.subr.bf16.mxu0 0
        %887 = vmatpush1.bf16.msra.mxu0 0
        %888 = vmatprep.subr.bf16.mxu0 0
        %889 = vmatpush1.bf16.msra.mxu0 0
        %890 = vmatprep.subr.bf16.mxu0 0
        %891 = vmatpush1.bf16.msra.mxu0 0
        %892 = vmatprep.mubr.bf16.mxu0 0
        %893 = vmatmul.mubr.bf16.gmra.mrb[0].mxu0 %v840
        %v894 = vpop.f32.mrb[0].mxu0
        %v895 = vadd.f32 0.0, %v894
        %v896 = vpop.f32.mrb[0].mxu0
        %v897 = vadd.f32 0.0, %v896
        %v898 = vpop.f32.mrb[0].mxu0
        %v899 = vadd.f32 0.0, %v898
        %v900 = vpop.f32.mrb[0].mxu0
        %v901 = vadd.f32 0.0, %v900
        %902 = vmatprep.mubr.bf16.mxu0 0
        %903 = vmatmul.mubr.bf16.gmra.mrb[0].mxu0 %v843
        %v904 = vpop.f32.mrb[0].mxu0
        %v905 = vadd.f32 0.0, %v904
        %v906 = vpop.f32.mrb[0].mxu0
        %v907 = vadd.f32 0.0, %v906
        %v908 = vpop.f32.mrb[0].mxu0
        %v909 = vadd.f32 0.0, %v908
        %v910 = vpop.f32.mrb[0].mxu0
        %v911 = vadd.f32 0.0, %v910
        %912 = vmatprep.mubr.bf16.mxu0 0
        %913 = vmatmul.mubr.bf16.gmra.mrb[0].mxu0 %v846
        %v914 = vpop.f32.mrb[0].mxu0
        %v915 = vadd.f32 0.0, %v914
        %v916 = vpop.f32.mrb[0].mxu0
        %v917 = vadd.f32 0.0, %v916
        %v918 = vpop.f32.mrb[0].mxu0
        %v919 = vadd.f32 0.0, %v918
        %v920 = vpop.f32.mrb[0].mxu0
        %v921 = vadd.f32 0.0, %v920
        %922 = vmatprep.mubr.bf16.mxu0 0
        %923 = vmatmul.mubr.bf16.gmra.mrb[0].mxu0 %v849
        %v924 = vpop.f32.mrb[0].mxu0
        %v925 = vadd.f32 0.0, %v924
        %v926 = vpop.f32.mrb[0].mxu0
        %v927 = vadd.f32 0.0, %v926
        %v928 = vpop.f32.mrb[0].mxu0
        %v929 = vadd.f32 0.0, %v928
        %v930 = vpop.f32.mrb[0].mxu0
        %v931 = vadd.f32 0.0, %v930
        %932 = vdwg.mxu0
        %933 = vmatprep.subr.bf16.mxu0 0
        %934 = vmatpush1.bf16.msra.mxu0 %v858
        %935 = vmatprep.subr.bf16.mxu0 0
        %936 = vmatpush1.bf16.msra.mxu0 0
        %937 = vmatprep.subr.bf16.mxu0 0
        %938 = vmatpush1.bf16.msra.mxu0 0
        %939 = vmatprep.subr.bf16.mxu0 0
        %940 = vmatpush1.bf16.msra.mxu0 0
        %941 = vmatprep.subr.bf16.mxu0 0
        %942 = vmatpush1.bf16.msra.mxu0 0
        %943 = vmatprep.subr.bf16.mxu0 0
        %944 = vmatpush1.bf16.msra.mxu0 0
        %945 = vmatprep.subr.bf16.mxu0 0
        %946 = vmatpush1.bf16.msra.mxu0 0
        %947 = vmatprep.subr.bf16.mxu0 0
        %948 = vmatpush1.bf16.msra.mxu0 0
        %949 = vmatprep.subr.bf16.mxu0 0
        %950 = vmatpush1.bf16.msra.mxu0 0
        %951 = vmatprep.subr.bf16.mxu0 0
        %952 = vmatpush1.bf16.msra.mxu0 0
        %953 = vmatprep.subr.bf16.mxu0 0
        %954 = vmatpush1.bf16.msra.mxu0 0
        %955 = vmatprep.subr.bf16.mxu0 0
        %956 = vmatpush1.bf16.msra.mxu0 0
        %957 = vmatprep.subr.bf16.mxu0 0
        %958 = vmatpush1.bf16.msra.mxu0 0
        %959 = vmatprep.subr.bf16.mxu0 0
        %960 = vmatpush1.bf16.msra.mxu0 0
        %961 = vmatprep.subr.bf16.mxu0 0
        %962 = vmatpush1.bf16.msra.mxu0 0
        %963 = vmatprep.subr.bf16.mxu0 0
        %964 = vmatpush1.bf16.msra.mxu0 0
        %965 = vmatprep.mubr.bf16.mxu0 0
        %966 = vmatmul.mubr.bf16.gmra.mrb[0].mxu0 %v840
        %v967 = vpop.f32.mrb[0].mxu0
        %v968 = vadd.f32 0.0, %v967
        %v969 = vpop.f32.mrb[0].mxu0
        %v970 = vpop.f32.mrb[0].mxu0
        %v971 = vadd.f32 0.0, %v970
        %v972 = vpop.f32.mrb[0].mxu0
        %973 = vmatprep.mubr.bf16.mxu0 0
        %974 = vmatmul.mubr.bf16.gmra.mrb[0].mxu0 %v843
        %v975 = vpop.f32.mrb[0].mxu0
        %v976 = vadd.f32 0.0, %v975
        %v977 = vpop.f32.mrb[0].mxu0
        %v978 = vpop.f32.mrb[0].mxu0
        %v979 = vadd.f32 0.0, %v978
        %v980 = vpop.f32.mrb[0].mxu0
        %981 = vmatprep.mubr.bf16.mxu0 0
        %982 = vmatmul.mubr.bf16.gmra.mrb[0].mxu0 %v846
        %v983 = vpop.f32.mrb[0].mxu0
        %v984 = vadd.f32 0.0, %v983
        %v985 = vpop.f32.mrb[0].mxu0
        %v986 = vpop.f32.mrb[0].mxu0
        %v987 = vadd.f32 0.0, %v986
        %v988 = vpop.f32.mrb[0].mxu0
        %989 = vmatprep.mubr.bf16.mxu0 0
        %990 = vmatmul.mubr.bf16.gmra.mrb[0].mxu0 %v849
        %v991 = vpop.f32.mrb[0].mxu0
        %v992 = vadd.f32 0.0, %v991
        %v993 = vpop.f32.mrb[0].mxu0
        %v994 = vpop.f32.mrb[0].mxu0
        %v995 = vadd.f32 0.0, %v994
        %v996 = vpop.f32.mrb[0].mxu0
        %997 = vdwg.mxu0
        %v998 = vadd.f32 %v712, %v895
        %v999 = vadd.f32 %v714, %v897
        %v1000 = vadd.f32 %v785, %v968
        %v1001 = vadd.f32 %v716, %v899
        %v1002 = vadd.f32 %v718, %v901
        %v1003 = vadd.f32 %v788, %v971
        %v1004 = vadd.f32 %v722, %v905
        %v1005 = vadd.f32 %v724, %v907
        %v1006 = vadd.f32 %v793, %v976
        %v1007 = vadd.f32 %v726, %v909
        %v1008 = vadd.f32 %v728, %v911
        %v1009 = vadd.f32 %v796, %v979
        %v1010 = vadd.f32 %v732, %v915
        %v1011 = vadd.f32 %v734, %v917
        %v1012 = vadd.f32 %v801, %v984
        %v1013 = vadd.f32 %v736, %v919
        %v1014 = vadd.f32 %v738, %v921
        %v1015 = vadd.f32 %v804, %v987
        %v1016 = vadd.f32 %v742, %v925
        %v1017 = vadd.f32 %v744, %v927
        %v1018 = vadd.f32 %v809, %v992
        %v1019 = vadd.f32 %v746, %v929
        %v1020 = vadd.f32 %v748, %v931
        %v1021 = vadd.f32 %v812, %v995
        %v1022 = vlaneseq
        %v1023 = vshrl.u32 %v1022, 7
        %v1024 = vadd.s32 %v1023, 8
        %vm1025 = vcmp.eq.s32.totalorder %v1023, 0
        %vm1026 = vcmp.eq.s32.totalorder %v1024, 0
        %v1027 = vrot.slane %v998, 7
        %v1028 = vrot.slane %v1004, 7
        %v1029 = vrot.slane %v1010, 7
        %v1030 = vrot.slane %v1016, 7
        %v1031 = vrot.slane %v1001, 7
        %v1032 = vrot.slane %v1007, 7
        %v1033 = vrot.slane %v1013, 7
        %v1034 = vrot.slane %v1019, 7
        %vm1035 = vcmp.lt.s32.totalorder %v1023, 1
        %v1036 = vsel %vm1035, %v1027, %v1031
        %v1037 = vsel %vm1035, %v1028, %v1032
        %v1038 = vsel %vm1035, %v1029, %v1033
        %v1039 = vsel %vm1035, %v1030, %v1034
        %v1040 = vsel %vm1035, %v1031, %v1027
        %v1041 = vsel %vm1035, %v1032, %v1028
        %v1042 = vsel %vm1035, %v1033, %v1029
        %v1043 = vsel %vm1035, %v1034, %v1030
        %v1044 = vsel %vm1025, 0.0, %v1040
        %v1045 = vsel %vm1026, 0.0, %v1036
        %v1046 = vsel %vm1025, 0.0, %v1041
        %v1047 = vsel %vm1026, 0.0, %v1037
        %v1048 = vsel %vm1025, 0.0, %v1042
        %v1049 = vsel %vm1026, 0.0, %v1038
        %v1050 = vsel %vm1025, 0.0, %v1043
        %v1051 = vsel %vm1026, 0.0, %v1039
        %vm1052 = vcmp.eq.s32.totalorder %v1023, 15
        %vm1053 = vcmp.eq.s32.totalorder %v1024, 15
        %v1054 = vrot.slane %v1000, 1
        %v1055 = vrot.slane %v1006, 1
        %v1056 = vrot.slane %v1012, 1
        %v1057 = vrot.slane %v1018, 1
        %v1058 = vrot.slane %v1003, 1
        %v1059 = vrot.slane %v1009, 1
        %v1060 = vrot.slane %v1015, 1
        %v1061 = vrot.slane %v1021, 1
        %vm1062 = vcmp.lt.s32.totalorder %v1023, 7
        %v1063 = vsel %vm1062, %v1054, %v1058
        %v1064 = vsel %vm1062, %v1055, %v1059
        %v1065 = vsel %vm1062, %v1056, %v1060
        %v1066 = vsel %vm1062, %v1057, %v1061
        %v1067 = vsel %vm1062, %v1058, %v1054
        %v1068 = vsel %vm1062, %v1059, %v1055
        %v1069 = vsel %vm1062, %v1060, %v1056
        %v1070 = vsel %vm1062, %v1061, %v1057
        %v1071 = vsel %vm1052, 0.0, %v1063
        %v1072 = vsel %vm1053, 0.0, %v1067
        %v1073 = vsel %vm1052, 0.0, %v1064
        %v1074 = vsel %vm1053, 0.0, %v1068
        %v1075 = vsel %vm1052, 0.0, %v1065
        %v1076 = vsel %vm1053, 0.0, %v1069
        %v1077 = vsel %vm1052, 0.0, %v1066
        %v1078 = vsel %vm1053, 0.0, %v1070
        %v1079 = vadd.f32 %v999, %v1044
        %v1080 = vadd.f32 %v1002, %v1045
        %v1081 = vadd.f32 %v1005, %v1046
        %v1082 = vadd.f32 %v1008, %v1047
        %v1083 = vadd.f32 %v1011, %v1048
        %v1084 = vadd.f32 %v1014, %v1049
        %v1085 = vadd.f32 %v1017, %v1050
        %v1086 = vadd.f32 %v1020, %v1051
        %v1087 = vadd.f32 %v1079, %v1071
        %v1088 = vadd.f32 %v1080, %v1072
        %v1089 = vadd.f32 %v1081, %v1073
        %v1090 = vadd.f32 %v1082, %v1074
        %v1091 = vadd.f32 %v1083, %v1075
        %v1092 = vadd.f32 %v1084, %v1076
        %v1093 = vadd.f32 %v1085, %v1077
        %v1094 = vadd.f32 %v1086, %v1078
        %v1095 = vld [vmem:[%s4] sm:$0x1]
        %v1097 = vlaneseq
        %v1098 = vshrl.u32 %v1097, 7
        %v1099 = vsub.s32 0, %v1098
        %v1100 = vrot.slane %v1095, %v1099
        %v1102 = vadd.f32 %v1087, %v1100
        %v1103 = vadd.f32 %v1088, %v1100
        %v1104 = vadd.f32 %v1089, %v1100
        %v1105 = vadd.f32 %v1090, %v1100
        %v1106 = vadd.f32 %v1091, %v1100
        %v1107 = vadd.f32 %v1092, %v1100
        %v1108 = vadd.f32 %v1093, %v1100
        %v1109 = vadd.f32 %v1094, %v1100
        %1110 = vst [vmem:[%s334] sm:$0xff] %v1102
        %1111 = vst [vmem:[%s334 + $0x8] sm:$0xff] %v1103
        %1112 = vst [vmem:[%s334 + $0x10] sm:$0xff] %v1104
        %1113 = vst [vmem:[%s334 + $0x18] sm:$0xff] %v1105
        %1114 = vst [vmem:[%s334 + $0x20] sm:$0xff] %v1106
        %1115 = vst [vmem:[%s334 + $0x28] sm:$0xff] %v1107
        %1116 = vst [vmem:[%s334 + $0x30] sm:$0xff] %v1108
        %1117 = vst [vmem:[%s334 + $0x38] sm:$0xff] %v1109
        %s1118 = sand.u32 %s183, 1
        %s1119 = scalar_lea.sflag [#allocation4], %s1118
        %s1120 = sand.u32 %s183, 1
        %s1121 = smul.addr %s1120, 64
        %s1122 = scalar_lea.vmem [#allocation3], %s1121
        // Predicated region
        $region41: #{tpu_custom_call.1} parent=39 // pred_check
          %p1123 = pneg %p193
        $region42: #{tpu_custom_call.1} parent=39 // pred_check_branch
          %1125 = sbr.rel (%p1123) target = $region44
        $region43: #{tpu_custom_call.1} parent=39 // pred_region
          %s1126 = smul.u32 4, %s24
          %s1128 = ssub.s32 1024, 1024
          %1129 = vsyncadd %s1119, %s1128
          %s1130 = smul.addr %s1126, 2
          %s1131 = smul.addr %s23, 32
          %s1132 = sadd.s32 %s1130, %s1131
          %s1133 = smul.addr %s1132, 128
          %s1134 = scalar_lea.hbm %s5, %s1133
          %s1135 = sshll.u32 %s1122, 4
          %s1136 = int_to_ptr.vmem [resolvable:$true] %s1135
          %1141 = dma.vmem_to_hbm [thread:$0]  %s1136, 1024, %s1134, %s1119, 128, 128, 8
        $region44: #{tpu_custom_call.1} parent=39 // pred_fallthru
          _
      $region40: #{tpu_custom_call.1} parent=5 // pred_fallthru
        _
      %p1142 = scmp.le.s32.totalorder 2, %s14
      // Predicated region
      $region45: #{tpu_custom_call.1} parent=5 // pred_check
        %p1143 = pneg %p1142
      $region46: #{tpu_custom_call.1} parent=5 // pred_check_branch
        %1145 = sbr.rel (%p1143) target = $region48
      $region47: #{tpu_custom_call.1} parent=5 // pred_region
        %s1146 = ssub.s32 %s14, 2
        // Predicated region
        $region49: #{tpu_custom_call.1} parent=47 // pred_check
          %p1147 = pneg %p199
        $region50: #{tpu_custom_call.1} parent=47 // pred_check_branch
          %1149 = sbr.rel (%p1147) target = $region52
        $region51: #{tpu_custom_call.1} parent=47 // pred_region
          %s1150 = sand.u32 %s184, 1
          %s1151 = scalar_lea.sflag [#allocation4], %s1150
          %s1152 = sand.u32 %s184, 1
          %s1153 = smul.addr %s1152, 64
          %s1154 = scalar_lea.vmem [#allocation3], %s1153
          %1155 = dma.done %s1151, 1024
        $region52: #{tpu_custom_call.1} parent=47 // pred_fallthru
          _
      $region48: #{tpu_custom_call.1} parent=5 // pred_fallthru
        _
    $region6: #{tpu_custom_call.1} parent=1 // loop_footer
      %s18 = sadd.s32 1, %s14
    $region7: #{tpu_custom_call.1} parent=1 // loop_footer_branch
      %13 = sbr.rel target = $region3
    $region8: #{tpu_custom_call.1} parent=1 // loop_exit
      _
    %1156 = vsyncpa [#allocation4], 1
    %s1157 = scalar_lea.sflag [#allocation4], 1
    %1158 = vsyncpa %s1157, 1

</llo_original>
